<compile_context>
chip_gen: v5e
topology: v5e:2x2
jax: 0.10.0
libtpu: 0.0.40
codegen_flags: <defaults>
</compile_context>

<pallas_src>
import jax
import jax.numpy as jnp
from jax.experimental import pallas as pl
from jax.experimental.pallas import tpu as pltpu


# ---------------------------------------------------------------------------
# Pallas kernel: copy + cast a lane-dense 2D tile to float32.
# ---------------------------------------------------------------------------
def _copy_cast_kernel(x_ref, o_ref):
    o_ref[...] = x_ref[...].astype(jnp.float32)


_LANE_CANDIDATES = (2048, 1024, 512, 384, 256, 128)


def _pick_lane_width(n):
    """Largest multiple of 128 (<= 2048) that divides n, or None."""
    for lane in _LANE_CANDIDATES:
        if n % lane == 0:
            return lane
    return None


def _sublane_align(dtype):
    """Row-tile alignment matching the input dtype's (sublane, 128) tiling."""
    itemsize = jnp.dtype(dtype).itemsize
    if itemsize == 1:
        return 32
    if itemsize == 2:
        return 16
    return 8


def _device_kind():
    try:
        return jax.devices()[0].device_kind.lower()
    except Exception:
        return ""


def _default_block_bytes():
    """Generation-aware block target (f32 side), inside default scoped VMEM."""
    kind = _device_kind()
    if "v7" in kind:
        # 2 bufs x (6 MiB in + 6 MiB out) = 24 MiB < 32 MiB scoped default.
        return 6 * 1024 * 1024
    if "v6" in kind or "trillium" in kind:
        # 16 MiB double-buffered < 32 MiB scoped default.
        return 4 * 1024 * 1024
    # v5e and unknown chips: 8 MiB double-buffered < 16 MiB scoped default.
    return 2 * 1024 * 1024


def _min_grid_steps():
    """At least 2 balanced grid steps on chips with 2 TensorCores."""
    kind = _device_kind()
    if "v7" in kind or "v4" in kind or ("v5" in kind and "lite" not in kind
                                        and "v5e" not in kind):
        return 2
    return 1


def _row_tile(rows, lane, target_block_bytes, align, min_steps):
    """Rows per block: ~target bytes of f32, `align`-multiple, exact divisor
    of `rows` when possible, and at least `min_steps` grid steps."""
    bytes_per_row = lane * 4  # f32 output is the wide side
    cap = max(align, (target_block_bytes // bytes_per_row) // align * align)
    if min_steps > 1 and rows >= min_steps * align:
        per_step = -(-rows // min_steps)                # ceil(rows / min_steps)
        per_step = -(-per_step // align) * align        # round up to align
        cap = min(cap, per_step)
    if cap >= rows:
        return rows                                     # full extent is legal
    # Prefer the largest aligned tile that divides rows exactly (no ragged
    # tail -> every step is a full-width unmasked store).
    for t in range(cap, align - 1, -align):
        if rows % t == 0:
            return t
    return cap                                          # ragged tail, masked


def _copy_cast_pallas(flat, lane, target_block_bytes, min_steps):
    """flat: 1D array with flat.size % lane == 0. Returns 1D float32 copy."""
    n = flat.shape[0]
    rows = n // lane
    x2d = flat.reshape(rows, lane)                      # contiguous reshape: free
    align = _sublane_align(flat.dtype)
    tile_rows = _row_tile(rows, lane, target_block_bytes, align, min_steps)
    grid = (pl.cdiv(rows, tile_rows),)
    in_bytes = n * jnp.dtype(flat.dtype).itemsize
    out_bytes = n * 4

    out2d = pl.pallas_call(
        _copy_cast_kernel,
        out_shape=jax.ShapeDtypeStruct((rows, lane), jnp.float32),
        grid_spec=pltpu.PrefetchScalarGridSpec(
            num_scalar_prefetch=0,
            grid=grid,
            in_specs=[pl.BlockSpec((tile_rows, lane), lambda i: (i, 0))],
            out_specs=pl.BlockSpec((tile_rows, lane), lambda i: (i, 0)),
        ),
        compiler_params=pltpu.CompilerParams(
            dimension_semantics=("parallel",),
        ),
        cost_estimate=pl.CostEstimate(
            flops=0, transcendentals=0, bytes_accessed=in_bytes + out_bytes),
    )(x2d)
    return out2d.reshape(n)


# ---------------------------------------------------------------------------
# Forward wrapper (mirrors GTBaseline.forward).
# ---------------------------------------------------------------------------
def gt_baseline_forward(responses_t, data_t, teaching_signal_t, *,
                        use_pallas=None, target_block_bytes=None):
    """Mirrors GTBaseline.forward.

    responses_t, data_t are unused by the reference forward (kept for parity).
    teaching_signal_t: [B, S, C] (any numeric dtype, e.g. int8/int32 one-hot).
    Returns dict(responses=[B, S, 1, C] f32, init_responses=[B, 1, C] f32).
    """
    del responses_t, data_t  # unused, exactly as in the PyTorch module
    B, S, C = teaching_signal_t.shape
    n = B * S * C

    if teaching_signal_t.dtype == jnp.float32:
        # clone() + .type(torch.float) of an f32 tensor is a pure copy; in
        # functional JAX the value itself suffices -> zero HBM traffic.
        copied = teaching_signal_t
    else:
        lane = _pick_lane_width(n)
        if use_pallas is None:
            # XLA's fused convert_element_type already runs at the HBM
            # roofline for a copy+cast; only pay the custom-call dispatch for
            # genuinely large arrays (>= 8 MiB of f32 output) with a
            # 128-divisible element count.
            use_pallas = (lane is not None) and (n * 4 >= (8 << 20))
        if use_pallas and lane is not None:
            if target_block_bytes is None:
                target_block_bytes = _default_block_bytes()
            flat = teaching_signal_t.reshape(n)          # contiguous: free
            copied = _copy_cast_pallas(
                flat, lane, target_block_bytes, _min_grid_steps()
            ).reshape(B, S, C)
        else:
            copied = teaching_signal_t.astype(jnp.float32)

    # unsqueeze(-2): [B, S, C] -> [B, S, 1, C]
    responses = copied[:, :, None, :]

    # init_responses is only B*C elements; casting a tiny slice of the *input*
    # fuses into one cheap XLA op instead of re-reading the big responses
    # array from HBM.
    # TODO(synk): folding this into the flattened Pallas kernel as a second
    # output has no clean index_map once [B,S,C] is flattened to [rows, L].
    init_responses = teaching_signal_t[:, 0, :].astype(jnp.float32)[:, None, :]

    return dict(responses=responses, init_responses=init_responses)


# ---------------------------------------------------------------------------
# Demo / self-check.
# ---------------------------------------------------------------------------
if __name__ == "__main__":
    key = jax.random.PRNGKey(0)

    def make_inputs(k, B, S, C, D=16, signal_dtype=jnp.int32):
        k1, k2, k3 = jax.random.split(k, 3)
        labels = jax.random.randint(k1, (B, S), 0, C)
        teaching = jax.nn.one_hot(labels, C, dtype=signal_dtype)
        responses_t = jax.random.randint(k2, (B, S), 0, C)
        data_t = jax.random.normal(k3, (B, S, D), dtype=jnp.float32)
        return responses_t, data_t, teaching

    def check(out, teaching):
        B, S, C = teaching.shape
        ref = teaching.astype(jnp.float32)[:, :, None, :]
        assert out["responses"].shape == (B, S, 1, C)
        assert out["responses"].dtype == jnp.float32
        assert out["init_responses"].shape == (B, 1, C)
        assert out["init_responses"].dtype == jnp.float32
        assert bool(jnp.all(out["responses"] == ref))
        assert bool(jnp.all(out["init_responses"] == ref[:, 0]))

    ks = jax.random.split(key, 5)

    # 1) Tiny spec-like shape -> auto path (XLA fused cast; Pallas dispatch
    #    would dominate here).
    r_t, d_t, ts = make_inputs(ks[0], B=2, S=8, C=32)
    out = gt_baseline_forward(r_t, d_t, ts)
    jax.block_until_ready(out["responses"])
    jax.block_until_ready(out["init_responses"])
    check(out, ts)

    # 2) float32 teaching signal -> short-circuit, no copy/cast at all.
    r_t, d_t, ts = make_inputs(ks[1], B=2, S=8, C=32, signal_dtype=jnp.float32)
    out = gt_baseline_forward(r_t, d_t, ts)
    jax.block_until_ready(out["responses"])
    check(out, ts)

    # 3) Pallas path forced: exact-divisor tiling with >= 2 balanced grid
    #    steps (n=32768 -> lane=2048, rows=16, tile_rows=8, grid=(2,)).
    r_t, d_t, ts = make_inputs(ks[2], B=4, S=64, C=128)
    out = gt_baseline_forward(r_t, d_t, ts, use_pallas=True,
                              target_block_bytes=64 * 1024)
    jax.block_until_ready(out["responses"])
    check(out, ts)

    # 4) Pallas path forced with a non-dividing row count (rows=20,
    #    tile_rows=16, grid=(2,)) to exercise the masked ragged-tail block.
    r_t, d_t, ts = make_inputs(ks[3], B=2, S=160, C=128)
    out = gt_baseline_forward(r_t, d_t, ts, use_pallas=True,
                              target_block_bytes=128 * 1024)
    jax.block_until_ready(out["responses"])
    check(out, ts)

    # 5) Narrow (uint8) one-hot kept narrow in HBM and widened to f32 inside
    #    the kernel; tile_rows aligned to 32 for the (32,128) int8 layout
    #    (rows=64, tile_rows=32, grid=(2,)).
    r_t, d_t, ts = make_inputs(ks[4], B=2, S=512, C=128, signal_dtype=jnp.uint8)
    out = gt_baseline_forward(r_t, d_t, ts, use_pallas=True,
                              target_block_bytes=256 * 1024)
    jax.block_until_ready(out["responses"])
    check(out, ts)

    print("KERNEL_OK")
</pallas_src>

<mosaic_0001>
module attributes {stable_mosaic.version = 11 : i64} {
  func.func @_copy_cast_kernel(%arg0: i32, %arg1: memref<8x2048xi32, #tpu.memory_space<vmem>>, %arg2: memref<8x2048xf32, #tpu.memory_space<vmem>>) attributes {dimension_semantics = [#tpu.dimension_semantics<parallel>], iteration_bounds = array<i64: 2>, scalar_prefetch = 0 : i64, scratch_operands = 0 : i64, tpu.core_type = #tpu.core_type<tc>, window_params = [{transform_indices = @transform_0, window_bounds = array<i64: 8, 2048>}, {transform_indices = @transform_1, window_bounds = array<i64: 8, 2048>}]} {
    %c0 = arith.constant 0 : index
    %c0_0 = arith.constant 0 : index
    %0 = vector.load %arg1[%c0, %c0_0] : memref<8x2048xi32, #tpu.memory_space<vmem>>, vector<8x2048xi32>
    %1 = arith.sitofp %0 : vector<8x2048xi32> to vector<8x2048xf32>
    %c0_1 = arith.constant 0 : index
    %c0_2 = arith.constant 0 : index
    %2 = vector.load %arg2[%c0_1, %c0_2] : memref<8x2048xf32, #tpu.memory_space<vmem>>, vector<8x2048xf32>
    tpu.vector_store %arg2[%c0_1, %c0_2], %1 {strides = array<i32>} : memref<8x2048xf32, #tpu.memory_space<vmem>>, vector<8x2048xf32>,
    return
  }
  func.func @transform_0(%arg0: i32) -> (i32, i32) {
    %c0_i32 = arith.constant 0 : i32
    %c0_i32_0 = arith.constant 0 : i32
    return %arg0, %c0_i32 : i32, i32
  }
  func.func @transform_1(%arg0: i32) -> (i32, i32) {
    %c0_i32 = arith.constant 0 : i32
    %c0_i32_0 = arith.constant 0 : i32
    return %arg0, %c0_i32 : i32, i32
  }
}

</mosaic_0001>

<llo_original>
// kernel: tpu_custom_call.1
$region0: #{tpu_custom_call.1}
  #allocation0 [shape = 'u32[]', space=smem, size = 0x4, offset = 0x4, fixed_abs, tag = 'smem constant byte address 0x4 - core index']
  #allocation1 [shape = 'u32[72,128]{1,0:T(1,128)}', space=vmem, size = 0x9000, scoped, tag = 'internal scratch']
  %s0 = inlined_call_operand.hbm [shape: s32[16,2048], index: 0, kind: input, shape index: {}]
  %s1 = inlined_call_operand.hbm [shape: f32[16,2048], index: 1, kind: output, shape index: {}]
  %s2 = sld [smem:[#allocation0]]
  $region41: #{tpu_custom_call.1} parent=0
    _
  %s4 = ssub.s32 1, %s2
  %s5 = scalar_select 0, %s4, %s2
  $region1: #{tpu_custom_call.1} parent=0
    #allocation2 [shape = 'u8[131072]{0}', space=vmem, size = 0x20000, scoped, tag = 'input window, operand 0']
    #allocation3 [shape = 's32[2]{0}', space=sflag, size = 0x8, scoped, tag = 'scoped memory for tpu_custom_call.1']
    #allocation4 [shape = 's32[2]{0}', space=sflag, size = 0x8, scoped, tag = 'scoped memory for tpu_custom_call.1']
    #allocation5 [shape = 'u8[131072]{0}', space=vmem, size = 0x20000, scoped, tag = 'output window, operand 0']
    %6 = vsyncpa [#allocation3], 0
    %s7 = scalar_lea.sflag [#allocation3], 1
    %8 = vsyncpa %s7, 0
    %9 = vsyncpa [#allocation4], 0
    %s10 = scalar_lea.sflag [#allocation4], 1
    %11 = vsyncpa %s10, 0
    loop: start=0, step=1, limit=4
    $region2: #{tpu_custom_call.1} parent=1 // loop_pre_header
      _
    $region3: #{tpu_custom_call.1} parent=1 // loop_header
      %s13 = sphi 0, %s17
      %p14 = scmp.ge.s32.totalorder %s13, 4
      %s23 = sphi 0, %s25
      %s26 = sphi 0, %s23
      %s27 = sphi 0, %s26
      %s43 = sphi 0, %s27
      %s49 = sphi 0, %s51
      %s52 = sphi 0, %s49
      %s53 = sphi 0, %s52
      %s69 = sphi 0, %s53
    $region4: #{tpu_custom_call.1} parent=1 // loop_header_branch
      %16 = sbr.rel (%p14) target = $region8
    $region5: #{tpu_custom_call.1} parent=1 // loop_body
      %s18 = ssub.s32 %s13, 1
      %s19 = ssub.s32 %s13, 2
      %s20 = sadd.s32 %s13, 1
      %s21 = ssub.s32 %s13, %s20
      %p22 = scmp.eq.s32.totalorder %s21, 0
      %s24 = sadd.s32 %s23, 1
      %s25 = scalar_select %p22, %s23, %s24
      %p28 = pneg %p22
      %p29 = scmp.eq.s32.totalorder %s13, 1
      %p30 = por %p28, %p29
      %p31 = scmp.ne.s32.totalorder %s23, %s26
      %p32 = scmp.eq.s32.totalorder %s13, 0
      %p33 = por %p31, %p32
      %p34 = scmp.ne.s32.totalorder %s23, %s26
      %p35 = scmp.eq.s32.totalorder %s18, 1
      %p36 = por %p34, %p35
      %p37 = scmp.ne.s32.totalorder %s26, %s27
      %p38 = scmp.eq.s32.totalorder %s18, 0
      %p39 = por %p37, %p38
      %p40 = scmp.ne.s32.totalorder %s26, %s27
      %p41 = scmp.eq.s32.totalorder %s19, 1
      %p42 = por %p40, %p41
      %p44 = scmp.ne.s32.totalorder %s27, %s43
      %p45 = scmp.eq.s32.totalorder %s19, 0
      %p46 = por %p44, %p45
      %s47 = ssub.s32 %s13, %s20
      %p48 = scmp.eq.s32.totalorder %s47, 0
      %s50 = sadd.s32 %s49, 1
      %s51 = scalar_select %p48, %s49, %s50
      %p54 = pneg %p48
      %p55 = scmp.eq.s32.totalorder %s13, 1
      %p56 = por %p54, %p55
      %p57 = scmp.ne.s32.totalorder %s49, %s52
      %p58 = scmp.eq.s32.totalorder %s13, 0
      %p59 = por %p57, %p58
      %p60 = scmp.ne.s32.totalorder %s49, %s52
      %p61 = scmp.eq.s32.totalorder %s18, 1
      %p62 = por %p60, %p61
      %p63 = scmp.ne.s32.totalorder %s52, %s53
      %p64 = scmp.eq.s32.totalorder %s18, 0
      %p65 = por %p63, %p64
      %p66 = scmp.ne.s32.totalorder %s52, %s53
      %p67 = scmp.eq.s32.totalorder %s19, 1
      %p68 = por %p66, %p67
      %p70 = scmp.ne.s32.totalorder %s53, %s69
      %p71 = scmp.eq.s32.totalorder %s19, 0
      %p72 = por %p70, %p71
      %p73 = scmp.le.s32.totalorder 1, %s13
      %p74 = scmp.lt.s32.totalorder %s13, 3
      %p75 = pnand %p73, %p74
      %p76 = pneg %p75
      // Predicated region
      $region9: #{tpu_custom_call.1} parent=5 // pred_check
        _
      $region10: #{tpu_custom_call.1} parent=5 // pred_check_branch
        %78 = sbr.rel (%p75) target = $region12
      $region11: #{tpu_custom_call.1} parent=5 // pred_region
        %s79 = ssub.s32 %s13, 1
      $region12: #{tpu_custom_call.1} parent=5 // pred_fallthru
        _
      %p80 = scmp.lt.s32.totalorder %s13, 2
      // Predicated region
      $region13: #{tpu_custom_call.1} parent=5 // pred_check
        %p81 = pneg %p80
      $region14: #{tpu_custom_call.1} parent=5 // pred_check_branch
        %83 = sbr.rel (%p81) target = $region16
      $region15: #{tpu_custom_call.1} parent=5 // pred_region
        // Predicated region
        $region17: #{tpu_custom_call.1} parent=15 // pred_check
          %p84 = pneg %p33
        $region18: #{tpu_custom_call.1} parent=15 // pred_check_branch
          %86 = sbr.rel (%p84) target = $region20
        $region19: #{tpu_custom_call.1} parent=15 // pred_region
          %s87 = sand.u32 %s23, 1
          %s88 = scalar_lea.sflag [#allocation3], %s87
          %s89 = sand.u32 %s23, 1
          %s90 = smul.addr %s89, 128
          %s91 = scalar_lea.vmem [#allocation2], %s90
          %93 = vsyncadd %s88, 0
          %s94 = smul.addr %s13, 16
          %s95 = smul.addr %s94, 8
          %s96 = scalar_lea.hbm %s0, %s95
          %s98 = sshll.u32 %s96, 4
          %s99 = int_to_ptr.hbm [resolvable:$true] %s98
          %s100 = sshll.u32 %s91, 4
          %s101 = int_to_ptr.vmem [resolvable:$true] %s100
          %103 = dma.hbm_to_vmem [thread:$0]  %s99, 2048, %s101, %s88
        $region20: #{tpu_custom_call.1} parent=15 // pred_fallthru
          _
      $region16: #{tpu_custom_call.1} parent=5 // pred_fallthru
        _
      %p104 = scmp.le.s32.totalorder 1, %s13
      %p105 = scmp.lt.s32.totalorder %s13, 3
      %p106 = pnand %p104, %p105
      %p107 = pneg %p106
      // Predicated region
      $region21: #{tpu_custom_call.1} parent=5 // pred_check
        _
      $region22: #{tpu_custom_call.1} parent=5 // pred_check_branch
        %109 = sbr.rel (%p106) target = $region24
      $region23: #{tpu_custom_call.1} parent=5 // pred_region
        %s110 = ssub.s32 %s13, 1
        %s111 = sand.u32 %s26, 1
        %s112 = scalar_lea.sflag [#allocation3], %s111
        %s113 = sand.u32 %s26, 1
        %s114 = smul.addr %s113, 128
        %s115 = scalar_lea.vmem [#allocation2], %s114
        // Predicated region
        $region25: #{tpu_custom_call.1} parent=23 // pred_check
          %p116 = pneg %p39
        $region26: #{tpu_custom_call.1} parent=23 // pred_check_branch
          %118 = sbr.rel (%p116) target = $region28
        $region27: #{tpu_custom_call.1} parent=23 // pred_region
          %120 = dma.done %s112, 2048
        $region28: #{tpu_custom_call.1} parent=23 // pred_fallthru
          _
        %s121 = sand.u32 %s26, 1
        %s122 = scalar_lea.sflag [#allocation3], %s121
        %s123 = sand.u32 %s26, 1
        %s124 = smul.addr %s123, 128
        %s125 = scalar_lea.vmem [#allocation2], %s124
        %p126 = pneg %p39
        %p127 = pneg %p36
        %p128 = pneg %p65
        %p129 = pneg %p62
        %s130 = sand.u32 %s52, 1
        %s131 = scalar_lea.sflag [#allocation4], %s130
        %s132 = sand.u32 %s52, 1
        %s133 = smul.addr %s132, 128
        %s134 = scalar_lea.vmem [#allocation5], %s133
        %v135 = vld [vmem:[%s115] sm:$0xff]
        %v136 = vld [vmem:[%s115 + $0x8] sm:$0xff]
        %v137 = vld [vmem:[%s115 + $0x10] sm:$0xff]
        %v138 = vld [vmem:[%s115 + $0x18] sm:$0xff]
        %v139 = vld [vmem:[%s115 + $0x20] sm:$0xff]
        %v140 = vld [vmem:[%s115 + $0x28] sm:$0xff]
        %v141 = vld [vmem:[%s115 + $0x30] sm:$0xff]
        %v142 = vld [vmem:[%s115 + $0x38] sm:$0xff]
        %v143 = vld [vmem:[%s115 + $0x40] sm:$0xff]
        %v144 = vld [vmem:[%s115 + $0x48] sm:$0xff]
        %v145 = vld [vmem:[%s115 + $0x50] sm:$0xff]
        %v146 = vld [vmem:[%s115 + $0x58] sm:$0xff]
        %v147 = vld [vmem:[%s115 + $0x60] sm:$0xff]
        %v148 = vld [vmem:[%s115 + $0x68] sm:$0xff]
        %v149 = vld [vmem:[%s115 + $0x70] sm:$0xff]
        %v150 = vld [vmem:[%s115 + $0x78] sm:$0xff]
        %v151 = vcvt.s32.f32 %v135
        %v152 = vcvt.s32.f32 %v136
        %v153 = vcvt.s32.f32 %v137
        %v154 = vcvt.s32.f32 %v138
        %v155 = vcvt.s32.f32 %v139
        %v156 = vcvt.s32.f32 %v140
        %v157 = vcvt.s32.f32 %v141
        %v158 = vcvt.s32.f32 %v142
        %v159 = vcvt.s32.f32 %v143
        %v160 = vcvt.s32.f32 %v144
        %v161 = vcvt.s32.f32 %v145
        %v162 = vcvt.s32.f32 %v146
        %v163 = vcvt.s32.f32 %v147
        %v164 = vcvt.s32.f32 %v148
        %v165 = vcvt.s32.f32 %v149
        %v166 = vcvt.s32.f32 %v150
        %167 = vst [vmem:[%s134] sm:$0xff] %v151
        %168 = vst [vmem:[%s134 + $0x8] sm:$0xff] %v152
        %169 = vst [vmem:[%s134 + $0x10] sm:$0xff] %v153
        %170 = vst [vmem:[%s134 + $0x18] sm:$0xff] %v154
        %171 = vst [vmem:[%s134 + $0x20] sm:$0xff] %v155
        %172 = vst [vmem:[%s134 + $0x28] sm:$0xff] %v156
        %173 = vst [vmem:[%s134 + $0x30] sm:$0xff] %v157
        %174 = vst [vmem:[%s134 + $0x38] sm:$0xff] %v158
        %175 = vst [vmem:[%s134 + $0x40] sm:$0xff] %v159
        %176 = vst [vmem:[%s134 + $0x48] sm:$0xff] %v160
        %177 = vst [vmem:[%s134 + $0x50] sm:$0xff] %v161
        %178 = vst [vmem:[%s134 + $0x58] sm:$0xff] %v162
        %179 = vst [vmem:[%s134 + $0x60] sm:$0xff] %v163
        %180 = vst [vmem:[%s134 + $0x68] sm:$0xff] %v164
        %181 = vst [vmem:[%s134 + $0x70] sm:$0xff] %v165
        %182 = vst [vmem:[%s134 + $0x78] sm:$0xff] %v166
        %s183 = sand.u32 %s52, 1
        %s184 = scalar_lea.sflag [#allocation4], %s183
        %s185 = sand.u32 %s52, 1
        %s186 = smul.addr %s185, 128
        %s187 = scalar_lea.vmem [#allocation5], %s186
        // Predicated region
        $region29: #{tpu_custom_call.1} parent=23 // pred_check
          %p188 = pneg %p62
        $region30: #{tpu_custom_call.1} parent=23 // pred_check_branch
          %190 = sbr.rel (%p188) target = $region32
        $region31: #{tpu_custom_call.1} parent=23 // pred_region
          %192 = vsyncadd %s184, 0
          %s193 = smul.addr %s18, 16
          %s194 = smul.addr %s193, 8
          %s195 = scalar_lea.hbm %s1, %s194
          %s197 = sshll.u32 %s187, 4
          %s198 = int_to_ptr.vmem [resolvable:$true] %s197
          %s199 = sshll.u32 %s195, 4
          %s200 = int_to_ptr.hbm [resolvable:$true] %s199
          %202 = dma.vmem_to_hbm [thread:$0]  %s198, 2048, %s200, %s184
        $region32: #{tpu_custom_call.1} parent=23 // pred_fallthru
          _
      $region24: #{tpu_custom_call.1} parent=5 // pred_fallthru
        _
      %p203 = scmp.le.s32.totalorder 2, %s13
      // Predicated region
      $region33: #{tpu_custom_call.1} parent=5 // pred_check
        %p204 = pneg %p203
      $region34: #{tpu_custom_call.1} parent=5 // pred_check_branch
        %206 = sbr.rel (%p204) target = $region36
      $region35: #{tpu_custom_call.1} parent=5 // pred_region
        %s207 = ssub.s32 %s13, 2
        // Predicated region
        $region37: #{tpu_custom_call.1} parent=35 // pred_check
          %p208 = pneg %p68
        $region38: #{tpu_custom_call.1} parent=35 // pred_check_branch
          %210 = sbr.rel (%p208) target = $region40
        $region39: #{tpu_custom_call.1} parent=35 // pred_region
          %s211 = sand.u32 %s53, 1
          %s212 = scalar_lea.sflag [#allocation4], %s211
          %s213 = sand.u32 %s53, 1
          %s214 = smul.addr %s213, 128
          %s215 = scalar_lea.vmem [#allocation5], %s214
          %217 = dma.done %s212, 2048
        $region40: #{tpu_custom_call.1} parent=35 // pred_fallthru
          _
      $region36: #{tpu_custom_call.1} parent=5 // pred_fallthru
        _
    $region6: #{tpu_custom_call.1} parent=1 // loop_footer
      %s17 = sadd.s32 1, %s13
    $region7: #{tpu_custom_call.1} parent=1 // loop_footer_branch
      %12 = sbr.rel target = $region3
    $region8: #{tpu_custom_call.1} parent=1 // loop_exit
      _
    %218 = vsyncpa [#allocation3], 1
    %s219 = scalar_lea.sflag [#allocation3], 1
    %220 = vsyncpa %s219, 1
    %221 = vsyncpa [#allocation4], 1
    %s222 = scalar_lea.sflag [#allocation4], 1
    %223 = vsyncpa %s222, 1

</llo_original>
